<compile_context>
chip_gen: v7x
topology: tpu7x:2x2x1
jax: 0.10.0
libtpu: 0.0.40
codegen_flags: <defaults>
</compile_context>

<pallas_src>
import jax
import jax.numpy as jnp
from jax.experimental import pallas as pl
from jax.experimental.pallas import tpu as pltpu

_LANE = 128
_SUBLANE = 8
# Cap on the double-buffered VMEM working set (x + out + pe blocks, padded to
# full sublanes).  48 MiB fits every generation once vmem_limit_bytes is raised
# (v5e/v6e: 128 MiB physical, v7x: 64 MiB per TensorCore).
_MAX_BUFFERED_BYTES = 48 << 20
# Below this padded single-block size, splitting into 2 tiles for v7x's second
# TensorCore only adds per-step overhead.
_MIN_SPLIT_BYTES = 512 << 10


def _round_up(v: int, m: int) -> int:
    return (v + m - 1) // m * m


def _build_sinusoidal_pe(embed_dim: int, max_len: int = 5000) -> jnp.ndarray:
    """Deterministic PE buffer, same math as the torch __init__ (concat sin|cos)."""
    assert embed_dim % 2 == 0, "PAT sinusoidal PE requires an even embed_dim"
    position = jnp.arange(0, max_len, dtype=jnp.float32)[:, None]           # (max_len, 1)
    div_term = jnp.exp(
        jnp.arange(0, embed_dim, 2, dtype=jnp.float32)
        * (-jnp.log(jnp.float32(10000.0)) / embed_dim)
    )                                                                        # (D/2,)
    sin_emb = jnp.sin(position * div_term)                                   # (max_len, D/2)
    cos_emb = jnp.cos(position * div_term)                                   # (max_len, D/2)
    pe = jnp.concatenate([sin_emb, cos_emb], axis=-1)                        # (max_len, D)
    return pe[None, :, :]                                                    # (1, max_len, D)


def _add_pe_kernel(x_ref, pe_ref, o_ref):
    # x_ref / o_ref: (B, tile); pe_ref: (1, tile). Sublane-broadcast add on the VPU.
    o_ref[...] = x_ref[...] + pe_ref[...]


def _tpu_vmem_capacity_bytes() -> int:
    """Per-core VMEM capacity; conservative fallback if the query is unavailable."""
    try:
        info = pltpu.get_tpu_info()
        cap = getattr(info, "vmem_capacity_bytes", None)
        if cap:
            return int(cap)
    except Exception:
        pass
    return 64 << 20  # v7x per-TC size — safe lower bound for all generations


def _choose_tile(total: int, padded_b: int, elem_bytes: int,
                 vmem_budget: int, max_block_bytes) -> int:
    """Largest lane-aligned tile whose padded, double-buffered blocks fit the budget."""
    # Per flattened element of `tile`: double-buffered x-in + out (padded_b rows
    # each) + pe (padded to 8 sublanes).
    bytes_per_tile_elem = 2 * elem_bytes * (2 * padded_b + _SUBLANE)
    tile = vmem_budget // bytes_per_tile_elem
    if max_block_bytes is not None:
        tile = min(tile, max_block_bytes // (padded_b * elem_bytes))
    tile = min(tile, _round_up(total, _LANE))
    tile = max(_LANE, (tile // _LANE) * _LANE)
    return tile


def sinusoidal_positional_embedding(
    x: jnp.ndarray,
    pe: jnp.ndarray,
    *,
    max_block_bytes: int | None = None,
) -> jnp.ndarray:
    """x: (B, S, D); pe: (1, max_len, D).  Returns x + pe[:, :S, :]."""
    B, S, D = x.shape
    _, max_len, pe_d = pe.shape
    assert pe_d == D, f"pe feature dim {pe_d} != x feature dim {D}"
    assert S <= max_len, f"seq_len {S} exceeds max_len {max_len}"

    dtype = x.dtype
    elem_bytes = jnp.dtype(dtype).itemsize
    total = S * D

    # Cast once in the wrapper: halves the pe HBM read for bf16 activations and
    # avoids a mixed-dtype promote / store-cast inside the kernel.
    pe = pe.astype(dtype)

    padded_b = _round_up(max(B, 1), _SUBLANE)           # (B, tile) pads to 8 sublanes
    vmem_cap = _tpu_vmem_capacity_bytes()
    vmem_budget = min(vmem_cap // 2, _MAX_BUFFERED_BYTES)

    tile = _choose_tile(total, padded_b, elem_bytes, vmem_budget, max_block_bytes)
    n_tiles = pl.cdiv(total, tile)

    # v7x has 2 TensorCores: for non-trivial inputs make sure the "parallel"
    # grid has at least 2 steps so both cores issue DMAs.
    if n_tiles == 1 and padded_b * total * elem_bytes > _MIN_SPLIT_BYTES:
        tile = max(_LANE, _round_up(pl.cdiv(total, 2), _LANE))
        n_tiles = pl.cdiv(total, tile)

    # Raise the scoped-VMEM limit explicitly (v5e default is only 16 MiB) but
    # stay within physical capacity; leave headroom for compiler scratch.
    buffered_bytes = 2 * tile * elem_bytes * (2 * padded_b + _SUBLANE)
    vmem_limit = int(min(vmem_cap, buffered_bytes + (16 << 20)))

    # Lane-dense flattened views.  The full pe table is passed; the BlockSpec
    # windows the first S*D elements (flattening preserves per-position rows:
    # pe_flat[0, k] == pe[0, k // D, k % D]).  Tail-of-grid reads past S*D hit
    # valid (unused) table rows or are clamped; the matching output stores are
    # masked by Pallas.
    x_flat = x.reshape(B, total)
    pe_flat = pe.reshape(1, max_len * D)

    out_flat = pl.pallas_call(
        _add_pe_kernel,
        out_shape=jax.ShapeDtypeStruct((B, total), dtype),
        grid_spec=pltpu.PrefetchScalarGridSpec(
            num_scalar_prefetch=0,
            grid=(n_tiles,),
            in_specs=[
                pl.BlockSpec((B, tile), lambda t: (0, t)),   # x: full batch per tile
                pl.BlockSpec((1, tile), lambda t: (0, t)),   # pe: each tile read once
            ],
            out_specs=pl.BlockSpec((B, tile), lambda t: (0, t)),
        ),
        compiler_params=pltpu.CompilerParams(
            dimension_semantics=("parallel",),   # megacore sharding on v7x
            vmem_limit_bytes=vmem_limit,
        ),
    )(x_flat, pe_flat)
    return out_flat.reshape(B, S, D)


if __name__ == "__main__":
    # Small shapes consistent with the module: batch=2, seq=8, embed_dim=32.
    B, S, D = 2, 8, 32
    MAX_LEN = 64

    key = jax.random.PRNGKey(0)
    x = jax.random.normal(key, (B, S, D), dtype=jnp.float32)
    pe = _build_sinusoidal_pe(D, MAX_LEN)
    ref = x + pe[:, :S, :]

    # 1) Default path: small input -> single lane-dense block.
    out = jax.block_until_ready(sinusoidal_positional_embedding(x, pe))
    assert out.shape == (B, S, D)
    assert jnp.allclose(out, ref, atol=1e-6), "mismatch vs reference (single block)"

    # 2) Force a multi-tile grid (tiny per-block budget -> 128-lane tiles).
    out_tiled = jax.block_until_ready(
        sinusoidal_positional_embedding(x, pe, max_block_bytes=4096)
    )
    assert jnp.allclose(out_tiled, ref, atol=1e-6), "mismatch vs reference (tiled)"

    # 3) Non-multiple-of-128 flattened length + forced tiling: exercises the
    #    cdiv grid with a masked partial tail block (S*D = 320, 3 tiles of 128).
    D2 = 40
    x2 = jax.random.normal(jax.random.PRNGKey(1), (B, S, D2), dtype=jnp.float32)
    pe2 = _build_sinusoidal_pe(D2, MAX_LEN)
    ref2 = x2 + pe2[:, :S, :]
    out2 = jax.block_until_ready(
        sinusoidal_positional_embedding(x2, pe2, max_block_bytes=4096)
    )
    assert jnp.allclose(out2, ref2, atol=1e-6), "mismatch vs reference (masked tail)"

    # 4) bf16 activations: pe is cast to the activation dtype in the wrapper.
    x_bf16 = x.astype(jnp.bfloat16)
    ref_bf16 = x_bf16 + pe.astype(jnp.bfloat16)[:, :S, :]
    out_bf16 = jax.block_until_ready(sinusoidal_positional_embedding(x_bf16, pe))
    assert out_bf16.dtype == jnp.bfloat16
    assert jnp.allclose(out_bf16.astype(jnp.float32), ref_bf16.astype(jnp.float32),
                        rtol=1e-2, atol=1e-2), "mismatch vs reference (bf16)"

    print("KERNEL_OK")
</pallas_src>

<mosaic_0001>
module attributes {stable_mosaic.version = 11 : i64} {
  func.func @_add_pe_kernel(%arg0: i32, %arg1: memref<2x256xf32, #tpu.memory_space<vmem>>, %arg2: memref<1x256xf32, #tpu.memory_space<vmem>>, %arg3: memref<2x256xf32, #tpu.memory_space<vmem>>) attributes {dimension_semantics = [#tpu.dimension_semantics<parallel>], iteration_bounds = array<i64: 1>, scalar_prefetch = 0 : i64, scratch_operands = 0 : i64, tpu.core_type = #tpu.core_type<tc>, window_params = [{transform_indices = @transform_0, window_bounds = array<i64: 2, 256>}, {transform_indices = @transform_1, window_bounds = array<i64: 1, 256>}, {transform_indices = @transform_2, window_bounds = array<i64: 2, 256>}]} {
    %c0 = arith.constant 0 : index
    %c0_0 = arith.constant 0 : index
    %0 = vector.load %arg1[%c0, %c0_0] : memref<2x256xf32, #tpu.memory_space<vmem>>, vector<2x256xf32>
    %c0_1 = arith.constant 0 : index
    %c0_2 = arith.constant 0 : index
    %1 = vector.load %arg2[%c0_1, %c0_2] : memref<1x256xf32, #tpu.memory_space<vmem>>, vector<1x256xf32>
    %2 = vector.broadcast %1 : vector<1x256xf32> to vector<2x256xf32>
    %3 = arith.addf %0, %2 : vector<2x256xf32>
    %c0_3 = arith.constant 0 : index
    %c0_4 = arith.constant 0 : index
    %4 = vector.load %arg3[%c0_3, %c0_4] : memref<2x256xf32, #tpu.memory_space<vmem>>, vector<2x256xf32>
    tpu.vector_store %arg3[%c0_3, %c0_4], %3 {strides = array<i32>} : memref<2x256xf32, #tpu.memory_space<vmem>>, vector<2x256xf32>,
    return
  }
  func.func @transform_0(%arg0: i32) -> (i32, i32) {
    %c0_i32 = arith.constant 0 : i32
    %c0_i32_0 = arith.constant 0 : i32
    return %c0_i32, %arg0 : i32, i32
  }
  func.func @transform_1(%arg0: i32) -> (i32, i32) {
    %c0_i32 = arith.constant 0 : i32
    %c0_i32_0 = arith.constant 0 : i32
    return %c0_i32, %arg0 : i32, i32
  }
  func.func @transform_2(%arg0: i32) -> (i32, i32) {
    %c0_i32 = arith.constant 0 : i32
    %c0_i32_0 = arith.constant 0 : i32
    return %c0_i32, %arg0 : i32, i32
  }
}

</mosaic_0001>

<llo_original>
// kernel: tpu_custom_call.1
$region0: #{tpu_custom_call.1}
  #allocation0 [shape = 'u32[]', space=smem, size = 0x4, offset = 0x4, fixed_abs, tag = 'smem constant byte address 0x4 - core index']
  #allocation1 [shape = 'u32[144,128]{1,0:T(1,128)}', space=vmem, size = 0x12000, scoped, tag = 'internal scratch']
  %s0 = inlined_call_operand.hbm [shape: f32[2,256], index: 0, kind: input, shape index: {}]
  %s1 = inlined_call_operand.hbm [shape: f32[1,2048], index: 1, kind: input, shape index: {}]
  %s2 = inlined_call_operand.hbm [shape: f32[2,256], index: 2, kind: output, shape index: {}]
  %s3 = sld [smem:[#allocation0]]
  $region26: #{tpu_custom_call.1} parent=0
    _
  %s5 = ssub.s32 1, %s3
  %s6 = scalar_select 0, %s5, %s3
  $region1: #{tpu_custom_call.1} parent=0
    #allocation2 [shape = 'u8[2048]{0}', space=vmem, size = 0x800, scoped, tag = 'input window, operand 0, single buffered']
    #allocation3 [shape = 's32[1]{0}', space=sflag, size = 0x4, scoped, tag = 'scoped memory for tpu_custom_call.1']
    #allocation4 [shape = 's32[1]{0}', space=sflag, size = 0x4, scoped, tag = 'scoped memory for tpu_custom_call.1']
    #allocation5 [shape = 'u8[1024]{0}', space=vmem, size = 0x400, scoped, tag = 'input window, operand 1, single buffered']
    #allocation6 [shape = 's32[1]{0}', space=sflag, size = 0x4, scoped, tag = 'scoped memory for tpu_custom_call.1']
    #allocation7 [shape = 'u8[2048]{0}', space=vmem, size = 0x800, scoped, tag = 'output window, operand 0, single buffered']
    %7 = vsyncpa [#allocation3], 0
    %8 = vsyncpa [#allocation6], 0
    %9 = vsyncpa [#allocation4], 0
    // Predicated region
    $region2: #{tpu_custom_call.1} parent=1 // pred_check
      _
    $region3: #{tpu_custom_call.1} parent=1 // pred_check_branch
      %11 = sbr.rel (0) target = $region5
    $region4: #{tpu_custom_call.1} parent=1 // pred_region
      %s13 = ssub.s32 64, 64
      %14 = vsyncadd [#allocation3], %s13
      %s16 = sshll.u32 [#allocation2], 4
      %s17 = int_to_ptr.vmem [resolvable:$true] %s16
      %19 = dma.hbm_to_vmem [thread:$0]  %s0, 64, %s17, [#allocation3]
    $region5: #{tpu_custom_call.1} parent=1 // pred_fallthru
      _
    // Predicated region
    $region6: #{tpu_custom_call.1} parent=1 // pred_check
      _
    $region7: #{tpu_custom_call.1} parent=1 // pred_check_branch
      %21 = sbr.rel (0) target = $region9
    $region8: #{tpu_custom_call.1} parent=1 // pred_region
      %s23 = ssub.s32 32, 32
      %24 = vsyncadd [#allocation6], %s23
      %s26 = sshll.u32 [#allocation5], 4
      %s27 = int_to_ptr.vmem [resolvable:$true] %s26
      %29 = dma.hbm_to_vmem [thread:$0]  %s1, 32, %s27, [#allocation6]
    $region9: #{tpu_custom_call.1} parent=1 // pred_fallthru
      _
    // Predicated region
    $region10: #{tpu_custom_call.1} parent=1 // pred_check
      _
    $region11: #{tpu_custom_call.1} parent=1 // pred_check_branch
      %31 = sbr.rel (0) target = $region13
    $region12: #{tpu_custom_call.1} parent=1 // pred_region
      %32 = dma.done [#allocation3], 64
    $region13: #{tpu_custom_call.1} parent=1 // pred_fallthru
      _
    // Predicated region
    $region14: #{tpu_custom_call.1} parent=1 // pred_check
      _
    $region15: #{tpu_custom_call.1} parent=1 // pred_check_branch
      %34 = sbr.rel (0) target = $region17
    $region16: #{tpu_custom_call.1} parent=1 // pred_region
      %35 = dma.done [#allocation6], 32
    $region17: #{tpu_custom_call.1} parent=1 // pred_fallthru
      _
    %v36 = vld [vmem:[#allocation2] sm:$0xf]
    %v37 = vld [vmem:[#allocation5] sm:$0x3]
    %v39 = vlaneseq
    %v40 = vshrl.u32 %v39, 7
    %v41 = vsub.s32 0, %v40
    %v42 = vrot.slane %v37, %v41
    %v43 = vlaneseq
    %v44 = vshrl.u32 %v43, 7
    %v45 = vsub.s32 1, %v44
    %v46 = vrot.slane %v37, %v45
    %v47 = vcombine.low %v42, %v46
    %v49 = vunpack.c.l.s4 1983009808
    %v50 = vunpack.c.0.s8 %v49
    %v51 = vlaneseq
    %v52 = vshrl.u32 %v51, 7
    %v53 = vsub.s32 %v50, %v52
    %v54 = vrot.slane %v47, %v53
    %v56 = vadd.f32 %v36, %v54
    %57 = vst [vmem:[#allocation7] sm:$0xf] %v56
    // Predicated region
    $region18: #{tpu_custom_call.1} parent=1 // pred_check
      _
    $region19: #{tpu_custom_call.1} parent=1 // pred_check_branch
      %59 = sbr.rel (0) target = $region21
    $region20: #{tpu_custom_call.1} parent=1 // pred_region
      %s61 = ssub.s32 64, 64
      %62 = vsyncadd [#allocation4], %s61
      %s64 = sshll.u32 [#allocation7], 4
      %s65 = int_to_ptr.vmem [resolvable:$true] %s64
      %67 = dma.vmem_to_hbm [thread:$0]  %s65, 64, %s2, [#allocation4]
    $region21: #{tpu_custom_call.1} parent=1 // pred_fallthru
      _
    // Predicated region
    $region22: #{tpu_custom_call.1} parent=1 // pred_check
      _
    $region23: #{tpu_custom_call.1} parent=1 // pred_check_branch
      %69 = sbr.rel (0) target = $region25
    $region24: #{tpu_custom_call.1} parent=1 // pred_region
      %70 = dma.done [#allocation4], 64
    $region25: #{tpu_custom_call.1} parent=1 // pred_fallthru
      _
    %71 = vsyncpa [#allocation3], 1
    %72 = vsyncpa [#allocation6], 1
    %73 = vsyncpa [#allocation4], 1

</llo_original>
